<compile_context>
chip_gen: v7x
topology: tpu7x:2x2x1
jax: 0.10.0
libtpu: 0.0.40
codegen_flags: <defaults>
</compile_context>

<pallas_src>
import functools
import math
from collections import deque

import jax
import jax.numpy as jnp
import numpy as np
from jax.experimental import pallas as pl
from jax.experimental.pallas import tpu as pltpu

MIN_PROB = 1e-7
MAX_PROB = 1.0 - 1e-7
MIN_H = -math.log(MAX_PROB)   # = -log(1 - 1e-7)
MAX_H = -math.log(MIN_PROB)   # = -log(1e-7)

# NT matmul: contract the class/lane axis of both operands (same dimension numbers as
# the QK^T contraction in the TPU flash/splash attention kernels), so the batch axis
# of the rhs lands on lanes in the result -> lane-dense per-row reductions.
_NT_DIM_NUMBERS = (((1,), (1,)), ((), ()))
# HIGHEST selects the multi-pass f32 MXU algorithm; the test tolerance below also
# covers the single-pass bf16 operand path in case a backend maps it differently.
_MXU_PRECISION = jax.lax.Precision.HIGHEST


# ----------------------------------------------------------------------------
# Pallas kernel: one batch tile -> softmax stats + one-hot label gather, both
# reduced on the MXU so H is emitted as a lane-dense (1, tile_n) row.
# ----------------------------------------------------------------------------
def _ogc_h_kernel(pred_ref, labels_ref, h_ref):
    x = pred_ref[...]                                   # (T, C) native dtype (bf16 ok)
    c = x.shape[1]

    # Row max in the input dtype (max is exact); the f32 widening fuses into the
    # subtract so no standalone f32 copy of the logits is materialized.
    m = jnp.max(x, axis=1, keepdims=True)               # (T, 1) column, broadcast only
    e = jnp.exp(x.astype(jnp.float32) - m.astype(jnp.float32))   # (T, C) f32, EUP

    # One-hot label mask: tiny (1, C) iota against the (T, 1) label column.
    col = jax.lax.broadcasted_iota(jnp.int32, (1, c), 1)
    e_y = jnp.where(col == labels_ref[...], e, 0.0)     # (T, C)

    # Per-row sums finished on the (otherwise idle) MXU so the result is lane-major:
    #   denom[0, j] = sum_c e[j, c]      num[0, j] = e[j, label_j]
    ones_row = jnp.ones((8, c), dtype=jnp.float32)      # 8 sublanes (native); row 0 used
    denom = jax.lax.dot_general(ones_row, e, _NT_DIM_NUMBERS,
                                precision=_MXU_PRECISION,
                                preferred_element_type=jnp.float32)[0:1, :]
    num = jax.lax.dot_general(ones_row, e_y, _NT_DIM_NUMBERS,
                              precision=_MXU_PRECISION,
                              preferred_element_type=jnp.float32)[0:1, :]

    # H = -log softmax(x)[label] = log(sum_c exp(x - m)) - (x_label - m); the row max
    # cancels between the two logs.  Underflow of e_y (or an out-of-range label) gives
    # log(0) = -inf -> H = +inf, which the clip maps to MAX_H — exactly the reference's
    # prob.clamp(1e-7, 1 - 1e-7) followed by -log.
    h = jnp.log(denom) - jnp.log(num)                   # (1, T) lane-dense
    h_ref[...] = jnp.clip(h, MIN_H, MAX_H)


# ----------------------------------------------------------------------------
# Tiling / VMEM policy (generation-aware)
# ----------------------------------------------------------------------------
@functools.lru_cache(maxsize=None)
def _vmem_limit_bytes():
    """Half the physical per-core VMEM, capped at 64 MiB: 64 MiB on v5e/v6e (128 MiB
    physical), 32 MiB on v7x (64 MiB physical)."""
    try:
        cap = int(pltpu.get_tpu_info().vmem_capacity_bytes)
    except Exception:                       # conservative fallback (v7x-sized)
        cap = 64 * 1024 * 1024
    return max(16 * 1024 * 1024, min(cap // 2, 64 * 1024 * 1024))


def _choose_tile_n(n, c, in_itemsize, max_tile_rows):
    """Largest batch tile whose double-buffered pipeline + f32 temporaries stay inside
    half the vmem limit, while keeping >= 2 grid steps so both of v7x's TensorCores
    get work through the "parallel" batch axis."""
    if n <= 8:
        return n                            # single full block (block == array dims)
    budget = _vmem_limit_bytes() // 2       # 2x headroom vs. the compiler limit
    c_pad = ((c + 127) // 128) * 128        # VMEM (8,128) tiling pads the lane dim
    per_row = (2 * c_pad * in_itemsize      # double-buffered pred tile
               + 2 * 128 * 4                # double-buffered labels tile
               + 3 * c_pad * 4              # live f32 temporaries (x - m, e, e_y)
               + 4 * 128 * 4)               # H row + slack
    # TODO(synk): for vocab-scale C, tile the class axis in-kernel (lane-chunked
    # online softmax) instead of shrinking the batch tile; for C < 128 a lane-folding
    # layout (128//C samples per row) would raise vreg occupancy — not implemented.
    tile = max(8, budget // per_row)
    half = -(-n // 2)
    if 2 * tile >= n:
        tile = ((half + 7) // 8) * 8        # ~2 tiles -> both cores busy on v7x
    else:
        tile = (tile // 8) * 8
    if max_tile_rows is not None:
        tile = min(tile, max(8, (max_tile_rows // 8) * 8))
    return max(8, min(tile, n))


@functools.partial(jax.jit, static_argnames=("max_tile_rows",))
def _ogc_forward_call(pred, labels2d, prob_thr, tau, boundary, *, max_tile_rows=None):
    n, c = pred.shape
    tile_n = _choose_tile_n(n, c, pred.dtype.itemsize, max_tile_rows)
    num_tiles = pl.cdiv(n, tile_n)

    h_rows = pl.pallas_call(
        _ogc_h_kernel,
        out_shape=jax.ShapeDtypeStruct((num_tiles, tile_n), jnp.float32),
        grid_spec=pltpu.PrefetchScalarGridSpec(
            num_scalar_prefetch=0,
            grid=(num_tiles,),
            in_specs=[
                # If profiling shows exposed DMA at large C on v5e/v6e, add
                # pipeline_mode=pl.Buffered(3) here (not on v7x: 64 MiB VMEM).
                pl.BlockSpec((tile_n, c), lambda i: (i, 0)),   # logits tile
                pl.BlockSpec((tile_n, 1), lambda i: (i, 0)),   # labels tile
            ],
            out_specs=pl.BlockSpec((1, tile_n), lambda i: (i, 0)),  # lane-dense H row
        ),
        compiler_params=pltpu.CompilerParams(
            dimension_semantics=("parallel",),   # v7x: 2 TensorCores split the batch
            vmem_limit_bytes=_vmem_limit_bytes(),
        ),
    )(pred, labels2d)

    # Rows past N in the last (partial) tile are padding garbage: slice them away
    # before anything reduces over the batch.
    h = h_rows.reshape(-1)[:n]

    # Clipped loss is a trivial elementwise op over N values — done in XLA instead of
    # paying a second kernel output stream (per perf review):
    #   p <= prob_thr : 1 - tau * p + boundary_term   (spec hardcodes the 1)
    #   otherwise     : mapping_p_to_loss(p) = -log(p) = H
    p_y_hat = jnp.exp(-h)
    loss = jnp.where(p_y_hat <= prob_thr, 1.0 - tau * p_y_hat + boundary, h)
    return jnp.mean(loss), h


def ogc_forward_pallas(pred, labels, prob_thr_t, tau_t, boundary_term,
                       *, max_tile_rows=None):
    """OGC forward hot path on TPU. Returns (mean clipped loss, per-sample H (N,)).

    pred: (N, C) logits.  bf16 is the preferred dtype on the HBM-bound generations
    (v5e/v6e) — it is DMA'd narrow and widened to f32 inside the kernel; f32 is also
    accepted.  labels: (N,) int class indices.
    """
    labels2d = jnp.asarray(labels, dtype=jnp.int32).reshape(-1, 1)
    return _ogc_forward_call(
        pred, labels2d,
        jnp.float32(prob_thr_t), jnp.float32(tau_t), jnp.float32(boundary_term),
        max_tile_rows=max_tile_rows)


# ----------------------------------------------------------------------------
# Host-side stateful wrapper mirroring OptimizedGradientClippingBase (CE case)
# ----------------------------------------------------------------------------
class OptimizedGradientClippingCE:
    def __init__(self, epsilon, time_frame_s, queue_size_q,
                 binary_search_tol, binary_search_max_iter):
        self.epsilon = epsilon
        self.time_frame_s = time_frame_s
        self.queue_size_q = queue_size_q
        self.binary_search_tol = binary_search_tol
        self.binary_search_max_iter = binary_search_max_iter
        self.min_prob = MIN_PROB
        self.max_prob = MAX_PROB
        self.min_H = MIN_H
        self.max_H = MAX_H
        self.lr_t = 1.0
        self.prob_thr_t = self.min_prob
        # CE mappings: grad(p) = -1/p  =>  tau = |grad(prob_thr)|
        self.tau_t = abs(self.mapping_p_to_grad(self.prob_thr_t))
        self.tau_update_count = 0
        self.queue_H = deque(maxlen=queue_size_q)
        self._pending_H = []          # device arrays; flushed lazily in one batched D2H
        self.sample_H = np.linspace(self.min_H, self.max_H, 1000)
        self.sample_p = np.exp(-self.sample_H)              # mapping_H_to_p
        self.sample_grad = -1.0 / self.sample_p             # mapping_p_to_grad (CE)
        self.sample_grad_abs = np.abs(self.sample_grad)
        self.info = {'tau_t': self.tau_t, 'prob_thr_t': self.prob_thr_t,
                     'mean_clean': 0, 'covar_clean': 0,
                     'mean_noisy': 0, 'covar_noisy': 0}

    @staticmethod
    def mapping_p_to_loss(p):
        return -math.log(p)

    @staticmethod
    def mapping_p_to_grad(p):
        return -1.0 / p

    def _flush_pending_H(self):
        # Batched device->host transfer of every H vector accumulated since the last
        # flush; queue_H is only consumed by get_tau_t so this preserves semantics.
        if not self._pending_H:
            return
        host = jax.device_get(self._pending_H)
        self._pending_H = []
        for h in host:
            self.queue_H.extend(np.asarray(h).reshape(-1).tolist())

    def forward(self, pred, labels, lr):
        self.lr_t = lr

        boundary_term = self.mapping_p_to_loss(self.prob_thr_t)
        mean_loss, h = ogc_forward_pallas(
            pred, labels,
            float(self.prob_thr_t), float(self.tau_t), float(boundary_term),
        )

        # H = -log(p_y_hat): keep on device, flush to the host-side queue lazily.
        self._pending_H.append(h)

        self.tau_update_count += 1
        if self.tau_update_count == self.time_frame_s:
            self._flush_pending_H()
            # TODO(synk): get_tau_t() requires a GMM fit (sklearn), truncated-normal
            # pdfs (scipy.stats) and a host-side binary search — host-side glue with
            # no Pallas equivalent; tau_t / prob_thr_t are left at their current values.
        self.tau_update_count %= self.time_frame_s

        self.info['tau_t'] = self.tau_t
        self.info['prob_thr_t'] = self.prob_thr_t
        return mean_loss


if __name__ == "__main__":
    key = jax.random.PRNGKey(0)
    k1, k2, k3, k4, k5, k6 = jax.random.split(key, 6)

    def ref_forward(pred, labels, prob_thr, tau, boundary):
        prob = jax.nn.softmax(pred.astype(jnp.float32), axis=1)
        prob = jnp.clip(prob, MIN_PROB, MAX_PROB)
        p = prob[jnp.arange(pred.shape[0]), labels]
        h = -jnp.log(p)
        loss = jnp.where(p <= prob_thr, 1.0 - tau * p + boundary, h)
        return jnp.mean(loss), h

    # Tolerance: the per-row sums run on the MXU; with the multi-pass f32 algorithm
    # the error is ~1e-6, but if a backend maps the operands to bf16 the worst-case
    # |dH| is ~8e-3, hence the 1e-2 gate.
    TOL = dict(rtol=1e-2, atol=1e-2)

    module = OptimizedGradientClippingCE(
        epsilon=0.1, time_frame_s=4, queue_size_q=64,
        binary_search_tol=1e-3, binary_search_max_iter=50,
    )
    C = 32
    boundary = module.mapping_p_to_loss(module.prob_thr_t)

    # --- case 1: single-tile path through the module (N=8 == one (8, C) block) ----
    N1 = 8
    pred1 = jax.random.normal(k1, (N1, C), dtype=jnp.float32)
    labels1 = jax.random.randint(k2, (N1,), 0, C, dtype=jnp.int32)
    loss1 = jax.block_until_ready(module.forward(pred1, labels1, lr=0.1))
    ref1, ref_h1 = ref_forward(pred1, labels1, module.prob_thr_t, module.tau_t, boundary)
    np.testing.assert_allclose(np.asarray(loss1), np.asarray(ref1), **TOL)

    # --- case 2: multi-tile grid with a partial last tile (N=20, forced tile=8) ---
    N2 = 20
    pred2 = jax.random.normal(k3, (N2, C), dtype=jnp.float32)
    labels2 = jax.random.randint(k4, (N2,), 0, C, dtype=jnp.int32)
    loss2, h2 = jax.block_until_ready(ogc_forward_pallas(
        pred2, labels2, module.prob_thr_t, module.tau_t, boundary, max_tile_rows=8))
    ref2, ref_h2 = ref_forward(pred2, labels2, module.prob_thr_t, module.tau_t, boundary)
    np.testing.assert_allclose(np.asarray(loss2), np.asarray(ref2), **TOL)
    np.testing.assert_allclose(np.asarray(h2), np.asarray(ref_h2), **TOL)

    # --- case 3: bf16 logits (preferred, HBM-halving input path), 2 full tiles -----
    N3 = 16
    pred3 = jax.random.normal(k5, (N3, C), dtype=jnp.float32).astype(jnp.bfloat16)
    labels3 = jax.random.randint(k6, (N3,), 0, C, dtype=jnp.int32)
    loss3, h3 = jax.block_until_ready(ogc_forward_pallas(
        pred3, labels3, module.prob_thr_t, module.tau_t, boundary))
    ref3, ref_h3 = ref_forward(pred3.astype(jnp.float32), labels3,
                               module.prob_thr_t, module.tau_t, boundary)
    np.testing.assert_allclose(np.asarray(loss3), np.asarray(ref3), rtol=2e-2, atol=2e-2)
    np.testing.assert_allclose(np.asarray(h3), np.asarray(ref_h3), rtol=2e-2, atol=2e-2)

    # --- the lazily-flushed H queue matches the reference H of case 1 -------------
    module._flush_pending_H()
    assert len(module.queue_H) == N1
    np.testing.assert_allclose(np.array(list(module.queue_H)),
                               np.asarray(ref_h1), **TOL)

    print("KERNEL_OK")
</pallas_src>

<mosaic_0001>
module attributes {stable_mosaic.version = 11 : i64} {
  func.func @_ogc_h_kernel(%arg0: i32, %arg1: memref<8x32xf32, #tpu.memory_space<vmem>>, %arg2: memref<8x1xi32, #tpu.memory_space<vmem>>, %arg3: memref<1x8xf32, #tpu.memory_space<vmem>>) attributes {dimension_semantics = [#tpu.dimension_semantics<parallel>], iteration_bounds = array<i64: 1>, scalar_prefetch = 0 : i64, scratch_operands = 0 : i64, tpu.core_type = #tpu.core_type<tc>, window_params = [{transform_indices = @transform_0, window_bounds = array<i64: 8, 32>}, {transform_indices = @transform_1, window_bounds = array<i64: 8, 1>}, {transform_indices = @transform_2, window_bounds = array<i64: 1, 8>}]} {
    %c0 = arith.constant 0 : index
    %c0_0 = arith.constant 0 : index
    %0 = vector.load %arg1[%c0, %c0_0] : memref<8x32xf32, #tpu.memory_space<vmem>>, vector<8x32xf32>
    %cst = arith.constant dense<0xFF800000> : vector<8xf32>
    %1 = vector.multi_reduction <maximumf>, %0, %cst [1] : vector<8x32xf32> to vector<8xf32>
    %2 = vector.shape_cast %1 : vector<8xf32> to vector<8x1xf32>
    %3 = vector.broadcast %2 : vector<8x1xf32> to vector<8x32xf32>
    %4 = arith.subf %0, %3 : vector<8x32xf32>
    %5 = math.exp %4 : vector<8x32xf32>
    %6 = tpu.iota {dimensions = array<i32: 1>} : vector<1x32xi32>
    %c0_1 = arith.constant 0 : index
    %c0_2 = arith.constant 0 : index
    %7 = vector.load %arg2[%c0_1, %c0_2] : memref<8x1xi32, #tpu.memory_space<vmem>>, vector<8x1xi32>
    %8 = vector.broadcast %6 : vector<1x32xi32> to vector<8x32xi32>
    %9 = vector.broadcast %7 : vector<8x1xi32> to vector<8x32xi32>
    %10 = arith.cmpi eq, %8, %9 : vector<8x32xi32>
    %cst_3 = arith.constant 0.000000e+00 : f32
    %11 = vector.broadcast %cst_3 : f32 to vector<8x32xf32>
    %12 = arith.select %10, %5, %11 : vector<8x32xi1>, vector<8x32xf32>
    %cst_4 = arith.constant 1.000000e+00 : f32
    %13 = vector.broadcast %cst_4 : f32 to vector<8x32xf32>
    %cst_5 = arith.constant dense<0.000000e+00> : vector<8x8xf32>
    %14 = tpu.matmul %13, %5, %cst_5 {dimension_numbers = #tpu.dot_dimension_numbers<[1], [1], [0], [0], [0, 0, 1, 0], [], []>, precision = #tpu.contract_precision<fp32>} : vector<8x32xf32>, vector<8x32xf32>, vector<8x8xf32> -> vector<8x8xf32>
    %15 = vector.extract_strided_slice %14 {offsets = [0, 0], sizes = [1, 8], strides = [1, 1]} : vector<8x8xf32> to vector<1x8xf32>
    %cst_6 = arith.constant dense<0.000000e+00> : vector<8x8xf32>
    %16 = tpu.matmul %13, %12, %cst_6 {dimension_numbers = #tpu.dot_dimension_numbers<[1], [1], [0], [0], [0, 0, 1, 0], [], []>, precision = #tpu.contract_precision<fp32>} : vector<8x32xf32>, vector<8x32xf32>, vector<8x8xf32> -> vector<8x8xf32>
    %17 = vector.extract_strided_slice %16 {offsets = [0, 0], sizes = [1, 8], strides = [1, 1]} : vector<8x8xf32> to vector<1x8xf32>
    %18 = math.log %15 : vector<1x8xf32>
    %19 = math.log %17 : vector<1x8xf32>
    %20 = arith.subf %18, %19 : vector<1x8xf32>
    %cst_7 = arith.constant 1.00000008E-7 : f32
    %cst_8 = arith.constant 16.1180954 : f32
    %21 = vector.broadcast %cst_7 : f32 to vector<1x8xf32>
    %22 = arith.maximumf %21, %20 : vector<1x8xf32>
    %23 = vector.broadcast %cst_8 : f32 to vector<1x8xf32>
    %24 = arith.minimumf %23, %22 : vector<1x8xf32>
    %c0_9 = arith.constant 0 : index
    %c0_10 = arith.constant 0 : index
    %25 = vector.load %arg3[%c0_9, %c0_10] : memref<1x8xf32, #tpu.memory_space<vmem>>, vector<1x8xf32>
    tpu.vector_store %arg3[%c0_9, %c0_10], %24 {strides = array<i32>} : memref<1x8xf32, #tpu.memory_space<vmem>>, vector<1x8xf32>,
    return
  }
  func.func @transform_0(%arg0: i32) -> (i32, i32) {
    %c0_i32 = arith.constant 0 : i32
    %c0_i32_0 = arith.constant 0 : i32
    return %arg0, %c0_i32 : i32, i32
  }
  func.func @transform_1(%arg0: i32) -> (i32, i32) {
    %c0_i32 = arith.constant 0 : i32
    %c0_i32_0 = arith.constant 0 : i32
    return %arg0, %c0_i32 : i32, i32
  }
  func.func @transform_2(%arg0: i32) -> (i32, i32) {
    %c0_i32 = arith.constant 0 : i32
    %c0_i32_0 = arith.constant 0 : i32
    return %arg0, %c0_i32 : i32, i32
  }
}

</mosaic_0001>

<llo_original>
// kernel: _ogc_forward_call.1
$region0: #{_ogc_forward_call.1}
  #allocation0 [shape = 'u32[]', space=smem, size = 0x4, offset = 0x4, fixed_abs, tag = 'smem constant byte address 0x4 - core index']
  #allocation1 [shape = 'u32[144,128]{1,0:T(1,128)}', space=vmem, size = 0x12000, scoped, tag = 'internal scratch']
  %s0 = inlined_call_operand.vmem [shape: f32[8,32], index: 0, kind: input, shape index: {}]
  %s1 = inlined_call_operand.vmem [shape: s32[8,1], index: 1, kind: input, shape index: {}]
  %s2 = inlined_call_operand.vmem [shape: f32[1,8], index: 2, kind: output, shape index: {}]
  %s3 = sld [smem:[#allocation0]]
  $region18: #{_ogc_forward_call.1} parent=0
    _
  %s5 = ssub.s32 1, %s3
  %s6 = scalar_select 0, %s5, %s3
  // Predicated region
  $region2: #{_ogc_forward_call.1} parent=0 // pred_check
    _
  $region3: #{_ogc_forward_call.1} parent=0 // pred_check_branch
    %8 = sbr.rel (0) target = $region5
  $region4: #{_ogc_forward_call.1} parent=0 // pred_region
    _
  $region5: #{_ogc_forward_call.1} parent=0 // pred_fallthru
    _
  // Predicated region
  $region6: #{_ogc_forward_call.1} parent=0 // pred_check
    _
  $region7: #{_ogc_forward_call.1} parent=0 // pred_check_branch
    %10 = sbr.rel (0) target = $region9
  $region8: #{_ogc_forward_call.1} parent=0 // pred_region
    _
  $region9: #{_ogc_forward_call.1} parent=0 // pred_fallthru
    _
  %v11 = vld [vmem:[%s0] sm:$0xff]
  %vm12 = vcmask 261120
  %v13 = vsel %vm12, %v11, -inf
  %14 = vmax.xlane.f32.xlu0 %v13
  %v15 = vpop.xlane.xlu0 %14
  %v16 = vsub.f32 %v11, %v15
  %v17 = vmul.f32 %v16, 1.442695
  %v18 = vpow.pop %v17
  %v19 = vlaneseq
  %v20 = vand.u32 %v19, 127
  %v21 = vld [vmem:[%s1] sm:$0xff]
  %22 = vset.pattern.permute.xlu0 0
  %23 = vperm.xlu0 %22, %v21
  %v24 = vpop.permute.xlu0 %23
  %vm25 = vcmp.eq.s32.totalorder %v20, %v24
  %v26 = vsel %vm25, %v18, 0.0
  %v28 = vsel %vm12, 1.0, 0
  %v31 = vsel %vm12, %v18, 0
  %33 = vmatprep.subr.mxu0 0.0
  %v34 = vand.u32 %v31, 4294901760
  %35 = vmatpush1.xpose.msra.mxu0 %v34
  %36 = vmatprep.subr.mxu0 0.0
  %37 = vmatpush1.xpose.msra.mxu0 0.0
  %38 = vmatprep.subr.mxu0 0.0
  %39 = vmatpush1.xpose.msra.mxu0 0.0
  %40 = vmatprep.subr.mxu0 0.0
  %41 = vmatpush1.xpose.msra.mxu0 0.0
  %42 = vmatprep.subr.mxu0 0.0
  %43 = vmatpush1.xpose.msra.mxu0 0.0
  %44 = vmatprep.subr.mxu0 0.0
  %45 = vmatpush1.xpose.msra.mxu0 0.0
  %46 = vmatprep.subr.mxu0 0.0
  %47 = vmatpush1.xpose.msra.mxu0 0.0
  %48 = vmatprep.subr.mxu0 0.0
  %49 = vmatpush1.xpose.msra.mxu0 0.0
  %50 = vmatprep.subr.mxu0 0.0
  %51 = vmatpush1.xpose.msra.mxu0 0.0
  %52 = vmatprep.subr.mxu0 0.0
  %53 = vmatpush1.xpose.msra.mxu0 0.0
  %54 = vmatprep.subr.mxu0 0.0
  %55 = vmatpush1.xpose.msra.mxu0 0.0
  %56 = vmatprep.subr.mxu0 0.0
  %57 = vmatpush1.xpose.msra.mxu0 0.0
  %58 = vmatprep.subr.mxu0 0.0
  %59 = vmatpush1.xpose.msra.mxu0 0.0
  %60 = vmatprep.subr.mxu0 0.0
  %61 = vmatpush1.xpose.msra.mxu0 0.0
  %62 = vmatprep.subr.mxu0 0.0
  %63 = vmatpush1.xpose.msra.mxu0 0.0
  %64 = vmatprep.subr.mxu0 0.0
  %65 = vmatpush1.xpose.msra.mxu0 0.0
  %66 = vmatprep.subr.mxu0 0.0
  %67 = vmatpush1.xpose.msra.mxu0 0.0
  %68 = vmatprep.subr.mxu0 0.0
  %69 = vmatpush1.xpose.msra.mxu0 0.0
  %70 = vmatprep.subr.mxu0 0.0
  %71 = vmatpush1.xpose.msra.mxu0 0.0
  %72 = vmatprep.subr.mxu0 0.0
  %73 = vmatpush1.xpose.msra.mxu0 0.0
  %74 = vmatprep.subr.mxu0 0.0
  %75 = vmatpush1.xpose.msra.mxu0 0.0
  %76 = vmatprep.subr.mxu0 0.0
  %77 = vmatpush1.xpose.msra.mxu0 0.0
  %78 = vmatprep.subr.mxu0 0.0
  %79 = vmatpush1.xpose.msra.mxu0 0.0
  %80 = vmatprep.subr.mxu0 0.0
  %81 = vmatpush1.xpose.msra.mxu0 0.0
  %82 = vmatprep.subr.mxu0 0.0
  %83 = vmatpush1.xpose.msra.mxu0 0.0
  %84 = vmatprep.subr.mxu0 0.0
  %85 = vmatpush1.xpose.msra.mxu0 0.0
  %86 = vmatprep.subr.mxu0 0.0
  %87 = vmatpush1.xpose.msra.mxu0 0.0
  %88 = vmatprep.subr.mxu0 0.0
  %89 = vmatpush1.xpose.msra.mxu0 0.0
  %90 = vmatprep.subr.mxu0 0.0
  %91 = vmatpush1.xpose.msra.mxu0 0.0
  %92 = vmatprep.subr.mxu0 0.0
  %93 = vmatpush1.xpose.msra.mxu0 0.0
  %94 = vmatprep.subr.mxu0 0.0
  %95 = vmatpush1.xpose.msra.mxu0 0.0
  %96 = vmatprep.subr.mxu0 0.0
  %97 = vmatpush1.xpose.msra.mxu0 0.0
  %98 = vmatprep.mubr.f32.mxu0 0.0
  %v99 = vand.u32 %v28, 4294901760
  %v100 = vsub.f32 %v28, %v99
  %v101 = vand.u32 %v100, 4294901760
  %v102 = vsub.f32 %v100, %v101
  %v103 = vand.u32 %v102, 4294901760
  %104 = vmatmul.mubr.f32.gmra.mrb[0].mxu0 %v103
  %v105 = vpop.f32.mrb[0].mxu0
  %v106 = vadd.f32 0.0, %v105
  %v107 = vpop.f32.mrb[0].mxu0
  %108 = vdwg.mxu0
  %109 = vmatprep.subr.mxu0 0.0
  %v110 = vand.u32 %v31, 4294901760
  %v111 = vsub.f32 %v31, %v110
  %v112 = vand.u32 %v111, 4294901760
  %v113 = vsub.f32 %v111, %v112
  %v114 = vand.u32 %v113, 4294901760
  %115 = vmatpush1.xpose.msra.mxu0 %v114
  %116 = vmatprep.subr.mxu0 0.0
  %117 = vmatpush1.xpose.msra.mxu0 0.0
  %118 = vmatprep.subr.mxu0 0.0
  %119 = vmatpush1.xpose.msra.mxu0 0.0
  %120 = vmatprep.subr.mxu0 0.0
  %121 = vmatpush1.xpose.msra.mxu0 0.0
  %122 = vmatprep.subr.mxu0 0.0
  %123 = vmatpush1.xpose.msra.mxu0 0.0
  %124 = vmatprep.subr.mxu0 0.0
  %125 = vmatpush1.xpose.msra.mxu0 0.0
  %126 = vmatprep.subr.mxu0 0.0
  %127 = vmatpush1.xpose.msra.mxu0 0.0
  %128 = vmatprep.subr.mxu0 0.0
  %129 = vmatpush1.xpose.msra.mxu0 0.0
  %130 = vmatprep.subr.mxu0 0.0
  %131 = vmatpush1.xpose.msra.mxu0 0.0
  %132 = vmatprep.subr.mxu0 0.0
  %133 = vmatpush1.xpose.msra.mxu0 0.0
  %134 = vmatprep.subr.mxu0 0.0
  %135 = vmatpush1.xpose.msra.mxu0 0.0
  %136 = vmatprep.subr.mxu0 0.0
  %137 = vmatpush1.xpose.msra.mxu0 0.0
  %138 = vmatprep.subr.mxu0 0.0
  %139 = vmatpush1.xpose.msra.mxu0 0.0
  %140 = vmatprep.subr.mxu0 0.0
  %141 = vmatpush1.xpose.msra.mxu0 0.0
  %142 = vmatprep.subr.mxu0 0.0
  %143 = vmatpush1.xpose.msra.mxu0 0.0
  %144 = vmatprep.subr.mxu0 0.0
  %145 = vmatpush1.xpose.msra.mxu0 0.0
  %146 = vmatprep.subr.mxu0 0.0
  %147 = vmatpush1.xpose.msra.mxu0 0.0
  %148 = vmatprep.subr.mxu0 0.0
  %149 = vmatpush1.xpose.msra.mxu0 0.0
  %150 = vmatprep.subr.mxu0 0.0
  %151 = vmatpush1.xpose.msra.mxu0 0.0
  %152 = vmatprep.subr.mxu0 0.0
  %153 = vmatpush1.xpose.msra.mxu0 0.0
  %154 = vmatprep.subr.mxu0 0.0
  %155 = vmatpush1.xpose.msra.mxu0 0.0
  %156 = vmatprep.subr.mxu0 0.0
  %157 = vmatpush1.xpose.msra.mxu0 0.0
  %158 = vmatprep.subr.mxu0 0.0
  %159 = vmatpush1.xpose.msra.mxu0 0.0
  %160 = vmatprep.subr.mxu0 0.0
  %161 = vmatpush1.xpose.msra.mxu0 0.0
  %162 = vmatprep.subr.mxu0 0.0
  %163 = vmatpush1.xpose.msra.mxu0 0.0
  %164 = vmatprep.subr.mxu0 0.0
  %165 = vmatpush1.xpose.msra.mxu0 0.0
  %166 = vmatprep.subr.mxu0 0.0
  %167 = vmatpush1.xpose.msra.mxu0 0.0
  %168 = vmatprep.subr.mxu0 0.0
  %169 = vmatpush1.xpose.msra.mxu0 0.0
  %170 = vmatprep.subr.mxu0 0.0
  %171 = vmatpush1.xpose.msra.mxu0 0.0
  %172 = vmatprep.subr.mxu0 0.0
  %173 = vmatpush1.xpose.msra.mxu0 0.0
  %174 = vmatprep.subr.mxu0 0.0
  %175 = vmatpush1.xpose.msra.mxu0 0.0
  %176 = vmatprep.subr.mxu0 0.0
  %177 = vmatpush1.xpose.msra.mxu0 0.0
  %178 = vmatprep.mubr.f32.mxu0 0.0
  %v179 = vand.u32 %v28, 4294901760
  %180 = vmatmul.mubr.f32.gmra.mrb[0].mxu0 %v179
  %v181 = vpop.f32.mrb[0].mxu0
  %v182 = vadd.f32 %v106, %v181
  %v183 = vpop.f32.mrb[0].mxu0
  %184 = vdwg.mxu0
  %185 = vmatprep.subr.mxu0 0.0
  %v186 = vand.u32 %v31, 4294901760
  %v187 = vsub.f32 %v31, %v186
  %188 = vmatpush1.xpose.msra.mxu0 %v187
  %189 = vmatprep.subr.mxu0 0.0
  %190 = vmatpush1.xpose.msra.mxu0 0.0
  %191 = vmatprep.subr.mxu0 0.0
  %192 = vmatpush1.xpose.msra.mxu0 0.0
  %193 = vmatprep.subr.mxu0 0.0
  %194 = vmatpush1.xpose.msra.mxu0 0.0
  %195 = vmatprep.subr.mxu0 0.0
  %196 = vmatpush1.xpose.msra.mxu0 0.0
  %197 = vmatprep.subr.mxu0 0.0
  %198 = vmatpush1.xpose.msra.mxu0 0.0
  %199 = vmatprep.subr.mxu0 0.0
  %200 = vmatpush1.xpose.msra.mxu0 0.0
  %201 = vmatprep.subr.mxu0 0.0
  %202 = vmatpush1.xpose.msra.mxu0 0.0
  %203 = vmatprep.subr.mxu0 0.0
  %204 = vmatpush1.xpose.msra.mxu0 0.0
  %205 = vmatprep.subr.mxu0 0.0
  %206 = vmatpush1.xpose.msra.mxu0 0.0
  %207 = vmatprep.subr.mxu0 0.0
  %208 = vmatpush1.xpose.msra.mxu0 0.0
  %209 = vmatprep.subr.mxu0 0.0
  %210 = vmatpush1.xpose.msra.mxu0 0.0
  %211 = vmatprep.subr.mxu0 0.0
  %212 = vmatpush1.xpose.msra.mxu0 0.0
  %213 = vmatprep.subr.mxu0 0.0
  %214 = vmatpush1.xpose.msra.mxu0 0.0
  %215 = vmatprep.subr.mxu0 0.0
  %216 = vmatpush1.xpose.msra.mxu0 0.0
  %217 = vmatprep.subr.mxu0 0.0
  %218 = vmatpush1.xpose.msra.mxu0 0.0
  %219 = vmatprep.subr.mxu0 0.0
  %220 = vmatpush1.xpose.msra.mxu0 0.0
  %221 = vmatprep.subr.mxu0 0.0
  %222 = vmatpush1.xpose.msra.mxu0 0.0
  %223 = vmatprep.subr.mxu0 0.0
  %224 = vmatpush1.xpose.msra.mxu0 0.0
  %225 = vmatprep.subr.mxu0 0.0
  %226 = vmatpush1.xpose.msra.mxu0 0.0
  %227 = vmatprep.subr.mxu0 0.0
  %228 = vmatpush1.xpose.msra.mxu0 0.0
  %229 = vmatprep.subr.mxu0 0.0
  %230 = vmatpush1.xpose.msra.mxu0 0.0
  %231 = vmatprep.subr.mxu0 0.0
  %232 = vmatpush1.xpose.msra.mxu0 0.0
  %233 = vmatprep.subr.mxu0 0.0
  %234 = vmatpush1.xpose.msra.mxu0 0.0
  %235 = vmatprep.subr.mxu0 0.0
  %236 = vmatpush1.xpose.msra.mxu0 0.0
  %237 = vmatprep.subr.mxu0 0.0
  %238 = vmatpush1.xpose.msra.mxu0 0.0
  %239 = vmatprep.subr.mxu0 0.0
  %240 = vmatpush1.xpose.msra.mxu0 0.0
  %241 = vmatprep.subr.mxu0 0.0
  %242 = vmatpush1.xpose.msra.mxu0 0.0
  %243 = vmatprep.subr.mxu0 0.0
  %244 = vmatpush1.xpose.msra.mxu0 0.0
  %245 = vmatprep.subr.mxu0 0.0
  %246 = vmatpush1.xpose.msra.mxu0 0.0
  %247 = vmatprep.subr.mxu0 0.0
  %248 = vmatpush1.xpose.msra.mxu0 0.0
  %249 = vmatprep.subr.mxu0 0.0
  %250 = vmatpush1.xpose.msra.mxu0 0.0
  %251 = vmatprep.mubr.f32.mxu0 0.0
  %v252 = vand.u32 %v28, 4294901760
  %v253 = vsub.f32 %v28, %v252
  %254 = vmatmul.mubr.f32.gmra.mrb[0].mxu0 %v253
  %v255 = vpop.f32.mrb[0].mxu0
  %v256 = vadd.f32 %v182, %v255
  %v257 = vpop.f32.mrb[0].mxu0
  %258 = vdwg.mxu0
  %259 = vmatprep.subr.mxu0 0.0
  %v260 = vand.u32 %v31, 4294901760
  %261 = vmatpush1.xpose.msra.mxu0 %v260
  %262 = vmatprep.subr.mxu0 0.0
  %263 = vmatpush1.xpose.msra.mxu0 0.0
  %264 = vmatprep.subr.mxu0 0.0
  %265 = vmatpush1.xpose.msra.mxu0 0.0
  %266 = vmatprep.subr.mxu0 0.0
  %267 = vmatpush1.xpose.msra.mxu0 0.0
  %268 = vmatprep.subr.mxu0 0.0
  %269 = vmatpush1.xpose.msra.mxu0 0.0
  %270 = vmatprep.subr.mxu0 0.0
  %271 = vmatpush1.xpose.msra.mxu0 0.0
  %272 = vmatprep.subr.mxu0 0.0
  %273 = vmatpush1.xpose.msra.mxu0 0.0
  %274 = vmatprep.subr.mxu0 0.0
  %275 = vmatpush1.xpose.msra.mxu0 0.0
  %276 = vmatprep.subr.mxu0 0.0
  %277 = vmatpush1.xpose.msra.mxu0 0.0
  %278 = vmatprep.subr.mxu0 0.0
  %279 = vmatpush1.xpose.msra.mxu0 0.0
  %280 = vmatprep.subr.mxu0 0.0
  %281 = vmatpush1.xpose.msra.mxu0 0.0
  %282 = vmatprep.subr.mxu0 0.0
  %283 = vmatpush1.xpose.msra.mxu0 0.0
  %284 = vmatprep.subr.mxu0 0.0
  %285 = vmatpush1.xpose.msra.mxu0 0.0
  %286 = vmatprep.subr.mxu0 0.0
  %287 = vmatpush1.xpose.msra.mxu0 0.0
  %288 = vmatprep.subr.mxu0 0.0
  %289 = vmatpush1.xpose.msra.mxu0 0.0
  %290 = vmatprep.subr.mxu0 0.0
  %291 = vmatpush1.xpose.msra.mxu0 0.0
  %292 = vmatprep.subr.mxu0 0.0
  %293 = vmatpush1.xpose.msra.mxu0 0.0
  %294 = vmatprep.subr.mxu0 0.0
  %295 = vmatpush1.xpose.msra.mxu0 0.0
  %296 = vmatprep.subr.mxu0 0.0
  %297 = vmatpush1.xpose.msra.mxu0 0.0
  %298 = vmatprep.subr.mxu0 0.0
  %299 = vmatpush1.xpose.msra.mxu0 0.0
  %300 = vmatprep.subr.mxu0 0.0
  %301 = vmatpush1.xpose.msra.mxu0 0.0
  %302 = vmatprep.subr.mxu0 0.0
  %303 = vmatpush1.xpose.msra.mxu0 0.0
  %304 = vmatprep.subr.mxu0 0.0
  %305 = vmatpush1.xpose.msra.mxu0 0.0
  %306 = vmatprep.subr.mxu0 0.0
  %307 = vmatpush1.xpose.msra.mxu0 0.0
  %308 = vmatprep.subr.mxu0 0.0
  %309 = vmatpush1.xpose.msra.mxu0 0.0
  %310 = vmatprep.subr.mxu0 0.0
  %311 = vmatpush1.xpose.msra.mxu0 0.0
  %312 = vmatprep.subr.mxu0 0.0
  %313 = vmatpush1.xpose.msra.mxu0 0.0
  %314 = vmatprep.subr.mxu0 0.0
  %315 = vmatpush1.xpose.msra.mxu0 0.0
  %316 = vmatprep.subr.mxu0 0.0
  %317 = vmatpush1.xpose.msra.mxu0 0.0
  %318 = vmatprep.subr.mxu0 0.0
  %319 = vmatpush1.xpose.msra.mxu0 0.0
  %320 = vmatprep.subr.mxu0 0.0
  %321 = vmatpush1.xpose.msra.mxu0 0.0
  %322 = vmatprep.subr.mxu0 0.0
  %323 = vmatpush1.xpose.msra.mxu0 0.0
  %324 = vmatprep.mubr.f32.mxu0 0.0
  %v325 = vand.u32 %v28, 4294901760
  %v326 = vsub.f32 %v28, %v325
  %v327 = vand.u32 %v326, 4294901760
  %328 = vmatmul.mubr.f32.gmra.mrb[0].mxu0 %v327
  %v329 = vpop.f32.mrb[0].mxu0
  %v330 = vadd.f32 %v256, %v329
  %v331 = vpop.f32.mrb[0].mxu0
  %332 = vdwg.mxu0
  %333 = vmatprep.subr.mxu0 0.0
  %v334 = vand.u32 %v31, 4294901760
  %v335 = vsub.f32 %v31, %v334
  %v336 = vand.u32 %v335, 4294901760
  %337 = vmatpush1.xpose.msra.mxu0 %v336
  %338 = vmatprep.subr.mxu0 0.0
  %339 = vmatpush1.xpose.msra.mxu0 0.0
  %340 = vmatprep.subr.mxu0 0.0
  %341 = vmatpush1.xpose.msra.mxu0 0.0
  %342 = vmatprep.subr.mxu0 0.0
  %343 = vmatpush1.xpose.msra.mxu0 0.0
  %344 = vmatprep.subr.mxu0 0.0
  %345 = vmatpush1.xpose.msra.mxu0 0.0
  %346 = vmatprep.subr.mxu0 0.0
  %347 = vmatpush1.xpose.msra.mxu0 0.0
  %348 = vmatprep.subr.mxu0 0.0
  %349 = vmatpush1.xpose.msra.mxu0 0.0
  %350 = vmatprep.subr.mxu0 0.0
  %351 = vmatpush1.xpose.msra.mxu0 0.0
  %352 = vmatprep.subr.mxu0 0.0
  %353 = vmatpush1.xpose.msra.mxu0 0.0
  %354 = vmatprep.subr.mxu0 0.0
  %355 = vmatpush1.xpose.msra.mxu0 0.0
  %356 = vmatprep.subr.mxu0 0.0
  %357 = vmatpush1.xpose.msra.mxu0 0.0
  %358 = vmatprep.subr.mxu0 0.0
  %359 = vmatpush1.xpose.msra.mxu0 0.0
  %360 = vmatprep.subr.mxu0 0.0
  %361 = vmatpush1.xpose.msra.mxu0 0.0
  %362 = vmatprep.subr.mxu0 0.0
  %363 = vmatpush1.xpose.msra.mxu0 0.0
  %364 = vmatprep.subr.mxu0 0.0
  %365 = vmatpush1.xpose.msra.mxu0 0.0
  %366 = vmatprep.subr.mxu0 0.0
  %367 = vmatpush1.xpose.msra.mxu0 0.0
  %368 = vmatprep.subr.mxu0 0.0
  %369 = vmatpush1.xpose.msra.mxu0 0.0
  %370 = vmatprep.subr.mxu0 0.0
  %371 = vmatpush1.xpose.msra.mxu0 0.0
  %372 = vmatprep.subr.mxu0 0.0
  %373 = vmatpush1.xpose.msra.mxu0 0.0
  %374 = vmatprep.subr.mxu0 0.0
  %375 = vmatpush1.xpose.msra.mxu0 0.0
  %376 = vmatprep.subr.mxu0 0.0
  %377 = vmatpush1.xpose.msra.mxu0 0.0
  %378 = vmatprep.subr.mxu0 0.0
  %379 = vmatpush1.xpose.msra.mxu0 0.0
  %380 = vmatprep.subr.mxu0 0.0
  %381 = vmatpush1.xpose.msra.mxu0 0.0
  %382 = vmatprep.subr.mxu0 0.0
  %383 = vmatpush1.xpose.msra.mxu0 0.0
  %384 = vmatprep.subr.mxu0 0.0
  %385 = vmatpush1.xpose.msra.mxu0 0.0
  %386 = vmatprep.subr.mxu0 0.0
  %387 = vmatpush1.xpose.msra.mxu0 0.0
  %388 = vmatprep.subr.mxu0 0.0
  %389 = vmatpush1.xpose.msra.mxu0 0.0
  %390 = vmatprep.subr.mxu0 0.0
  %391 = vmatpush1.xpose.msra.mxu0 0.0
  %392 = vmatprep.subr.mxu0 0.0
  %393 = vmatpush1.xpose.msra.mxu0 0.0
  %394 = vmatprep.subr.mxu0 0.0
  %395 = vmatpush1.xpose.msra.mxu0 0.0
  %396 = vmatprep.subr.mxu0 0.0
  %397 = vmatpush1.xpose.msra.mxu0 0.0
  %398 = vmatprep.subr.mxu0 0.0
  %399 = vmatpush1.xpose.msra.mxu0 0.0
  %400 = vmatprep.mubr.f32.mxu0 0.0
  %v401 = vand.u32 %v28, 4294901760
  %402 = vmatmul.mubr.f32.gmra.mrb[0].mxu0 %v401
  %v403 = vpop.f32.mrb[0].mxu0
  %v404 = vadd.f32 %v330, %v403
  %v405 = vpop.f32.mrb[0].mxu0
  %406 = vdwg.mxu0
  %407 = vmatprep.subr.mxu0 0.0
  %v408 = vand.u32 %v31, 4294901760
  %409 = vmatpush1.xpose.msra.mxu0 %v408
  %410 = vmatprep.subr.mxu0 0.0
  %411 = vmatpush1.xpose.msra.mxu0 0.0
  %412 = vmatprep.subr.mxu0 0.0
  %413 = vmatpush1.xpose.msra.mxu0 0.0
  %414 = vmatprep.subr.mxu0 0.0
  %415 = vmatpush1.xpose.msra.mxu0 0.0
  %416 = vmatprep.subr.mxu0 0.0
  %417 = vmatpush1.xpose.msra.mxu0 0.0
  %418 = vmatprep.subr.mxu0 0.0
  %419 = vmatpush1.xpose.msra.mxu0 0.0
  %420 = vmatprep.subr.mxu0 0.0
  %421 = vmatpush1.xpose.msra.mxu0 0.0
  %422 = vmatprep.subr.mxu0 0.0
  %423 = vmatpush1.xpose.msra.mxu0 0.0
  %424 = vmatprep.subr.mxu0 0.0
  %425 = vmatpush1.xpose.msra.mxu0 0.0
  %426 = vmatprep.subr.mxu0 0.0
  %427 = vmatpush1.xpose.msra.mxu0 0.0
  %428 = vmatprep.subr.mxu0 0.0
  %429 = vmatpush1.xpose.msra.mxu0 0.0
  %430 = vmatprep.subr.mxu0 0.0
  %431 = vmatpush1.xpose.msra.mxu0 0.0
  %432 = vmatprep.subr.mxu0 0.0
  %433 = vmatpush1.xpose.msra.mxu0 0.0
  %434 = vmatprep.subr.mxu0 0.0
  %435 = vmatpush1.xpose.msra.mxu0 0.0
  %436 = vmatprep.subr.mxu0 0.0
  %437 = vmatpush1.xpose.msra.mxu0 0.0
  %438 = vmatprep.subr.mxu0 0.0
  %439 = vmatpush1.xpose.msra.mxu0 0.0
  %440 = vmatprep.subr.mxu0 0.0
  %441 = vmatpush1.xpose.msra.mxu0 0.0
  %442 = vmatprep.subr.mxu0 0.0
  %443 = vmatpush1.xpose.msra.mxu0 0.0
  %444 = vmatprep.subr.mxu0 0.0
  %445 = vmatpush1.xpose.msra.mxu0 0.0
  %446 = vmatprep.subr.mxu0 0.0
  %447 = vmatpush1.xpose.msra.mxu0 0.0
  %448 = vmatprep.subr.mxu0 0.0
  %449 = vmatpush1.xpose.msra.mxu0 0.0
  %450 = vmatprep.subr.mxu0 0.0
  %451 = vmatpush1.xpose.msra.mxu0 0.0
  %452 = vmatprep.subr.mxu0 0.0
  %453 = vmatpush1.xpose.msra.mxu0 0.0
  %454 = vmatprep.subr.mxu0 0.0
  %455 = vmatpush1.xpose.msra.mxu0 0.0
  %456 = vmatprep.subr.mxu0 0.0
  %457 = vmatpush1.xpose.msra.mxu0 0.0
  %458 = vmatprep.subr.mxu0 0.0
  %459 = vmatpush1.xpose.msra.mxu0 0.0
  %460 = vmatprep.subr.mxu0 0.0
  %461 = vmatpush1.xpose.msra.mxu0 0.0
  %462 = vmatprep.subr.mxu0 0.0
  %463 = vmatpush1.xpose.msra.mxu0 0.0
  %464 = vmatprep.subr.mxu0 0.0
  %465 = vmatpush1.xpose.msra.mxu0 0.0
  %466 = vmatprep.subr.mxu0 0.0
  %467 = vmatpush1.xpose.msra.mxu0 0.0
  %468 = vmatprep.subr.mxu0 0.0
  %469 = vmatpush1.xpose.msra.mxu0 0.0
  %470 = vmatprep.subr.mxu0 0.0
  %471 = vmatpush1.xpose.msra.mxu0 0.0
  %472 = vmatprep.mubr.f32.mxu0 0.0
  %v473 = vand.u32 %v28, 4294901760
  %474 = vmatmul.mubr.f32.gmra.mrb[0].mxu0 %v473
  %v475 = vpop.f32.mrb[0].mxu0
  %v476 = vadd.f32 %v404, %v475
  %v477 = vpop.f32.mrb[0].mxu0
  %478 = vdwg.mxu0
  %v480 = vsel %vm12, %v26, 0
  %482 = vmatprep.subr.mxu0 0.0
  %v483 = vand.u32 %v480, 4294901760
  %484 = vmatpush1.xpose.msra.mxu0 %v483
  %485 = vmatprep.subr.mxu0 0.0
  %486 = vmatpush1.xpose.msra.mxu0 0.0
  %487 = vmatprep.subr.mxu0 0.0
  %488 = vmatpush1.xpose.msra.mxu0 0.0
  %489 = vmatprep.subr.mxu0 0.0
  %490 = vmatpush1.xpose.msra.mxu0 0.0
  %491 = vmatprep.subr.mxu0 0.0
  %492 = vmatpush1.xpose.msra.mxu0 0.0
  %493 = vmatprep.subr.mxu0 0.0
  %494 = vmatpush1.xpose.msra.mxu0 0.0
  %495 = vmatprep.subr.mxu0 0.0
  %496 = vmatpush1.xpose.msra.mxu0 0.0
  %497 = vmatprep.subr.mxu0 0.0
  %498 = vmatpush1.xpose.msra.mxu0 0.0
  %499 = vmatprep.subr.mxu0 0.0
  %500 = vmatpush1.xpose.msra.mxu0 0.0
  %501 = vmatprep.subr.mxu0 0.0
  %502 = vmatpush1.xpose.msra.mxu0 0.0
  %503 = vmatprep.subr.mxu0 0.0
  %504 = vmatpush1.xpose.msra.mxu0 0.0
  %505 = vmatprep.subr.mxu0 0.0
  %506 = vmatpush1.xpose.msra.mxu0 0.0
  %507 = vmatprep.subr.mxu0 0.0
  %508 = vmatpush1.xpose.msra.mxu0 0.0
  %509 = vmatprep.subr.mxu0 0.0
  %510 = vmatpush1.xpose.msra.mxu0 0.0
  %511 = vmatprep.subr.mxu0 0.0
  %512 = vmatpush1.xpose.msra.mxu0 0.0
  %513 = vmatprep.subr.mxu0 0.0
  %514 = vmatpush1.xpose.msra.mxu0 0.0
  %515 = vmatprep.subr.mxu0 0.0
  %516 = vmatpush1.xpose.msra.mxu0 0.0
  %517 = vmatprep.subr.mxu0 0.0
  %518 = vmatpush1.xpose.msra.mxu0 0.0
  %519 = vmatprep.subr.mxu0 0.0
  %520 = vmatpush1.xpose.msra.mxu0 0.0
  %521 = vmatprep.subr.mxu0 0.0
  %522 = vmatpush1.xpose.msra.mxu0 0.0
  %523 = vmatprep.subr.mxu0 0.0
  %524 = vmatpush1.xpose.msra.mxu0 0.0
  %525 = vmatprep.subr.mxu0 0.0
  %526 = vmatpush1.xpose.msra.mxu0 0.0
  %527 = vmatprep.subr.mxu0 0.0
  %528 = vmatpush1.xpose.msra.mxu0 0.0
  %529 = vmatprep.subr.mxu0 0.0
  %530 = vmatpush1.xpose.msra.mxu0 0.0
  %531 = vmatprep.subr.mxu0 0.0
  %532 = vmatpush1.xpose.msra.mxu0 0.0
  %533 = vmatprep.subr.mxu0 0.0
  %534 = vmatpush1.xpose.msra.mxu0 0.0
  %535 = vmatprep.subr.mxu0 0.0
  %536 = vmatpush1.xpose.msra.mxu0 0.0
  %537 = vmatprep.subr.mxu0 0.0
  %538 = vmatpush1.xpose.msra.mxu0 0.0
  %539 = vmatprep.subr.mxu0 0.0
  %540 = vmatpush1.xpose.msra.mxu0 0.0
  %541 = vmatprep.subr.mxu0 0.0
  %542 = vmatpush1.xpose.msra.mxu0 0.0
  %543 = vmatprep.subr.mxu0 0.0
  %544 = vmatpush1.xpose.msra.mxu0 0.0
  %545 = vmatprep.subr.mxu0 0.0
  %546 = vmatpush1.xpose.msra.mxu0 0.0
  %547 = vmatprep.mubr.f32.mxu0 0.0
  %v548 = vand.u32 %v28, 4294901760
  %v549 = vsub.f32 %v28, %v548
  %v550 = vand.u32 %v549, 4294901760
  %v551 = vsub.f32 %v549, %v550
  %v552 = vand.u32 %v551, 4294901760
  %553 = vmatmul.mubr.f32.gmra.mrb[0].mxu0 %v552
  %v554 = vpop.f32.mrb[0].mxu0
  %v555 = vadd.f32 0.0, %v554
  %v556 = vpop.f32.mrb[0].mxu0
  %557 = vdwg.mxu0
  %558 = vmatprep.subr.mxu0 0.0
  %v559 = vand.u32 %v480, 4294901760
  %v560 = vsub.f32 %v480, %v559
  %v561 = vand.u32 %v560, 4294901760
  %v562 = vsub.f32 %v560, %v561
  %v563 = vand.u32 %v562, 4294901760
  %564 = vmatpush1.xpose.msra.mxu0 %v563
  %565 = vmatprep.subr.mxu0 0.0
  %566 = vmatpush1.xpose.msra.mxu0 0.0
  %567 = vmatprep.subr.mxu0 0.0
  %568 = vmatpush1.xpose.msra.mxu0 0.0
  %569 = vmatprep.subr.mxu0 0.0
  %570 = vmatpush1.xpose.msra.mxu0 0.0
  %571 = vmatprep.subr.mxu0 0.0
  %572 = vmatpush1.xpose.msra.mxu0 0.0
  %573 = vmatprep.subr.mxu0 0.0
  %574 = vmatpush1.xpose.msra.mxu0 0.0
  %575 = vmatprep.subr.mxu0 0.0
  %576 = vmatpush1.xpose.msra.mxu0 0.0
  %577 = vmatprep.subr.mxu0 0.0
  %578 = vmatpush1.xpose.msra.mxu0 0.0
  %579 = vmatprep.subr.mxu0 0.0
  %580 = vmatpush1.xpose.msra.mxu0 0.0
  %581 = vmatprep.subr.mxu0 0.0
  %582 = vmatpush1.xpose.msra.mxu0 0.0
  %583 = vmatprep.subr.mxu0 0.0
  %584 = vmatpush1.xpose.msra.mxu0 0.0
  %585 = vmatprep.subr.mxu0 0.0
  %586 = vmatpush1.xpose.msra.mxu0 0.0
  %587 = vmatprep.subr.mxu0 0.0
  %588 = vmatpush1.xpose.msra.mxu0 0.0
  %589 = vmatprep.subr.mxu0 0.0
  %590 = vmatpush1.xpose.msra.mxu0 0.0
  %591 = vmatprep.subr.mxu0 0.0
  %592 = vmatpush1.xpose.msra.mxu0 0.0
  %593 = vmatprep.subr.mxu0 0.0
  %594 = vmatpush1.xpose.msra.mxu0 0.0
  %595 = vmatprep.subr.mxu0 0.0
  %596 = vmatpush1.xpose.msra.mxu0 0.0
  %597 = vmatprep.subr.mxu0 0.0
  %598 = vmatpush1.xpose.msra.mxu0 0.0
  %599 = vmatprep.subr.mxu0 0.0
  %600 = vmatpush1.xpose.msra.mxu0 0.0
  %601 = vmatprep.subr.mxu0 0.0
  %602 = vmatpush1.xpose.msra.mxu0 0.0
  %603 = vmatprep.subr.mxu0 0.0
  %604 = vmatpush1.xpose.msra.mxu0 0.0
  %605 = vmatprep.subr.mxu0 0.0
  %606 = vmatpush1.xpose.msra.mxu0 0.0
  %607 = vmatprep.subr.mxu0 0.0
  %608 = vmatpush1.xpose.msra.mxu0 0.0
  %609 = vmatprep.subr.mxu0 0.0
  %610 = vmatpush1.xpose.msra.mxu0 0.0
  %611 = vmatprep.subr.mxu0 0.0
  %612 = vmatpush1.xpose.msra.mxu0 0.0
  %613 = vmatprep.subr.mxu0 0.0
  %614 = vmatpush1.xpose.msra.mxu0 0.0
  %615 = vmatprep.subr.mxu0 0.0
  %616 = vmatpush1.xpose.msra.mxu0 0.0
  %617 = vmatprep.subr.mxu0 0.0
  %618 = vmatpush1.xpose.msra.mxu0 0.0
  %619 = vmatprep.subr.mxu0 0.0
  %620 = vmatpush1.xpose.msra.mxu0 0.0
  %621 = vmatprep.subr.mxu0 0.0
  %622 = vmatpush1.xpose.msra.mxu0 0.0
  %623 = vmatprep.subr.mxu0 0.0
  %624 = vmatpush1.xpose.msra.mxu0 0.0
  %625 = vmatprep.subr.mxu0 0.0
  %626 = vmatpush1.xpose.msra.mxu0 0.0
  %627 = vmatprep.mubr.f32.mxu0 0.0
  %v628 = vand.u32 %v28, 4294901760
  %629 = vmatmul.mubr.f32.gmra.mrb[0].mxu0 %v628
  %v630 = vpop.f32.mrb[0].mxu0
  %v631 = vadd.f32 %v555, %v630
  %v632 = vpop.f32.mrb[0].mxu0
  %633 = vdwg.mxu0
  %634 = vmatprep.subr.mxu0 0.0
  %v635 = vand.u32 %v480, 4294901760
  %v636 = vsub.f32 %v480, %v635
  %637 = vmatpush1.xpose.msra.mxu0 %v636
  %638 = vmatprep.subr.mxu0 0.0
  %639 = vmatpush1.xpose.msra.mxu0 0.0
  %640 = vmatprep.subr.mxu0 0.0
  %641 = vmatpush1.xpose.msra.mxu0 0.0
  %642 = vmatprep.subr.mxu0 0.0
  %643 = vmatpush1.xpose.msra.mxu0 0.0
  %644 = vmatprep.subr.mxu0 0.0
  %645 = vmatpush1.xpose.msra.mxu0 0.0
  %646 = vmatprep.subr.mxu0 0.0
  %647 = vmatpush1.xpose.msra.mxu0 0.0
  %648 = vmatprep.subr.mxu0 0.0
  %649 = vmatpush1.xpose.msra.mxu0 0.0
  %650 = vmatprep.subr.mxu0 0.0
  %651 = vmatpush1.xpose.msra.mxu0 0.0
  %652 = vmatprep.subr.mxu0 0.0
  %653 = vmatpush1.xpose.msra.mxu0 0.0
  %654 = vmatprep.subr.mxu0 0.0
  %655 = vmatpush1.xpose.msra.mxu0 0.0
  %656 = vmatprep.subr.mxu0 0.0
  %657 = vmatpush1.xpose.msra.mxu0 0.0
  %658 = vmatprep.subr.mxu0 0.0
  %659 = vmatpush1.xpose.msra.mxu0 0.0
  %660 = vmatprep.subr.mxu0 0.0
  %661 = vmatpush1.xpose.msra.mxu0 0.0
  %662 = vmatprep.subr.mxu0 0.0
  %663 = vmatpush1.xpose.msra.mxu0 0.0
  %664 = vmatprep.subr.mxu0 0.0
  %665 = vmatpush1.xpose.msra.mxu0 0.0
  %666 = vmatprep.subr.mxu0 0.0
  %667 = vmatpush1.xpose.msra.mxu0 0.0
  %668 = vmatprep.subr.mxu0 0.0
  %669 = vmatpush1.xpose.msra.mxu0 0.0
  %670 = vmatprep.subr.mxu0 0.0
  %671 = vmatpush1.xpose.msra.mxu0 0.0
  %672 = vmatprep.subr.mxu0 0.0
  %673 = vmatpush1.xpose.msra.mxu0 0.0
  %674 = vmatprep.subr.mxu0 0.0
  %675 = vmatpush1.xpose.msra.mxu0 0.0
  %676 = vmatprep.subr.mxu0 0.0
  %677 = vmatpush1.xpose.msra.mxu0 0.0
  %678 = vmatprep.subr.mxu0 0.0
  %679 = vmatpush1.xpose.msra.mxu0 0.0
  %680 = vmatprep.subr.mxu0 0.0
  %681 = vmatpush1.xpose.msra.mxu0 0.0
  %682 = vmatprep.subr.mxu0 0.0
  %683 = vmatpush1.xpose.msra.mxu0 0.0
  %684 = vmatprep.subr.mxu0 0.0
  %685 = vmatpush1.xpose.msra.mxu0 0.0
  %686 = vmatprep.subr.mxu0 0.0
  %687 = vmatpush1.xpose.msra.mxu0 0.0
  %688 = vmatprep.subr.mxu0 0.0
  %689 = vmatpush1.xpose.msra.mxu0 0.0
  %690 = vmatprep.subr.mxu0 0.0
  %691 = vmatpush1.xpose.msra.mxu0 0.0
  %692 = vmatprep.subr.mxu0 0.0
  %693 = vmatpush1.xpose.msra.mxu0 0.0
  %694 = vmatprep.subr.mxu0 0.0
  %695 = vmatpush1.xpose.msra.mxu0 0.0
  %696 = vmatprep.subr.mxu0 0.0
  %697 = vmatpush1.xpose.msra.mxu0 0.0
  %698 = vmatprep.subr.mxu0 0.0
  %699 = vmatpush1.xpose.msra.mxu0 0.0
  %700 = vmatprep.mubr.f32.mxu0 0.0
  %v701 = vand.u32 %v28, 4294901760
  %v702 = vsub.f32 %v28, %v701
  %703 = vmatmul.mubr.f32.gmra.mrb[0].mxu0 %v702
  %v704 = vpop.f32.mrb[0].mxu0
  %v705 = vadd.f32 %v631, %v704
  %v706 = vpop.f32.mrb[0].mxu0
  %707 = vdwg.mxu0
  %708 = vmatprep.subr.mxu0 0.0
  %v709 = vand.u32 %v480, 4294901760
  %710 = vmatpush1.xpose.msra.mxu0 %v709
  %711 = vmatprep.subr.mxu0 0.0
  %712 = vmatpush1.xpose.msra.mxu0 0.0
  %713 = vmatprep.subr.mxu0 0.0
  %714 = vmatpush1.xpose.msra.mxu0 0.0
  %715 = vmatprep.subr.mxu0 0.0
  %716 = vmatpush1.xpose.msra.mxu0 0.0
  %717 = vmatprep.subr.mxu0 0.0
  %718 = vmatpush1.xpose.msra.mxu0 0.0
  %719 = vmatprep.subr.mxu0 0.0
  %720 = vmatpush1.xpose.msra.mxu0 0.0
  %721 = vmatprep.subr.mxu0 0.0
  %722 = vmatpush1.xpose.msra.mxu0 0.0
  %723 = vmatprep.subr.mxu0 0.0
  %724 = vmatpush1.xpose.msra.mxu0 0.0
  %725 = vmatprep.subr.mxu0 0.0
  %726 = vmatpush1.xpose.msra.mxu0 0.0
  %727 = vmatprep.subr.mxu0 0.0
  %728 = vmatpush1.xpose.msra.mxu0 0.0
  %729 = vmatprep.subr.mxu0 0.0
  %730 = vmatpush1.xpose.msra.mxu0 0.0
  %731 = vmatprep.subr.mxu0 0.0
  %732 = vmatpush1.xpose.msra.mxu0 0.0
  %733 = vmatprep.subr.mxu0 0.0
  %734 = vmatpush1.xpose.msra.mxu0 0.0
  %735 = vmatprep.subr.mxu0 0.0
  %736 = vmatpush1.xpose.msra.mxu0 0.0
  %737 = vmatprep.subr.mxu0 0.0
  %738 = vmatpush1.xpose.msra.mxu0 0.0
  %739 = vmatprep.subr.mxu0 0.0
  %740 = vmatpush1.xpose.msra.mxu0 0.0
  %741 = vmatprep.subr.mxu0 0.0
  %742 = vmatpush1.xpose.msra.mxu0 0.0
  %743 = vmatprep.subr.mxu0 0.0
  %744 = vmatpush1.xpose.msra.mxu0 0.0
  %745 = vmatprep.subr.mxu0 0.0
  %746 = vmatpush1.xpose.msra.mxu0 0.0
  %747 = vmatprep.subr.mxu0 0.0
  %748 = vmatpush1.xpose.msra.mxu0 0.0
  %749 = vmatprep.subr.mxu0 0.0
  %750 = vmatpush1.xpose.msra.mxu0 0.0
  %751 = vmatprep.subr.mxu0 0.0
  %752 = vmatpush1.xpose.msra.mxu0 0.0
  %753 = vmatprep.subr.mxu0 0.0
  %754 = vmatpush1.xpose.msra.mxu0 0.0
  %755 = vmatprep.subr.mxu0 0.0
  %756 = vmatpush1.xpose.msra.mxu0 0.0
  %757 = vmatprep.subr.mxu0 0.0
  %758 = vmatpush1.xpose.msra.mxu0 0.0
  %759 = vmatprep.subr.mxu0 0.0
  %760 = vmatpush1.xpose.msra.mxu0 0.0
  %761 = vmatprep.subr.mxu0 0.0
  %762 = vmatpush1.xpose.msra.mxu0 0.0
  %763 = vmatprep.subr.mxu0 0.0
  %764 = vmatpush1.xpose.msra.mxu0 0.0
  %765 = vmatprep.subr.mxu0 0.0
  %766 = vmatpush1.xpose.msra.mxu0 0.0
  %767 = vmatprep.subr.mxu0 0.0
  %768 = vmatpush1.xpose.msra.mxu0 0.0
  %769 = vmatprep.subr.mxu0 0.0
  %770 = vmatpush1.xpose.msra.mxu0 0.0
  %771 = vmatprep.subr.mxu0 0.0
  %772 = vmatpush1.xpose.msra.mxu0 0.0
  %773 = vmatprep.mubr.f32.mxu0 0.0
  %v774 = vand.u32 %v28, 4294901760
  %v775 = vsub.f32 %v28, %v774
  %v776 = vand.u32 %v775, 4294901760
  %777 = vmatmul.mubr.f32.gmra.mrb[0].mxu0 %v776
  %v778 = vpop.f32.mrb[0].mxu0
  %v779 = vadd.f32 %v705, %v778
  %v780 = vpop.f32.mrb[0].mxu0
  %781 = vdwg.mxu0
  %782 = vmatprep.subr.mxu0 0.0
  %v783 = vand.u32 %v480, 4294901760
  %v784 = vsub.f32 %v480, %v783
  %v785 = vand.u32 %v784, 4294901760
  %786 = vmatpush1.xpose.msra.mxu0 %v785
  %787 = vmatprep.subr.mxu0 0.0
  %788 = vmatpush1.xpose.msra.mxu0 0.0
  %789 = vmatprep.subr.mxu0 0.0
  %790 = vmatpush1.xpose.msra.mxu0 0.0
  %791 = vmatprep.subr.mxu0 0.0
  %792 = vmatpush1.xpose.msra.mxu0 0.0
  %793 = vmatprep.subr.mxu0 0.0
  %794 = vmatpush1.xpose.msra.mxu0 0.0
  %795 = vmatprep.subr.mxu0 0.0
  %796 = vmatpush1.xpose.msra.mxu0 0.0
  %797 = vmatprep.subr.mxu0 0.0
  %798 = vmatpush1.xpose.msra.mxu0 0.0
  %799 = vmatprep.subr.mxu0 0.0
  %800 = vmatpush1.xpose.msra.mxu0 0.0
  %801 = vmatprep.subr.mxu0 0.0
  %802 = vmatpush1.xpose.msra.mxu0 0.0
  %803 = vmatprep.subr.mxu0 0.0
  %804 = vmatpush1.xpose.msra.mxu0 0.0
  %805 = vmatprep.subr.mxu0 0.0
  %806 = vmatpush1.xpose.msra.mxu0 0.0
  %807 = vmatprep.subr.mxu0 0.0
  %808 = vmatpush1.xpose.msra.mxu0 0.0
  %809 = vmatprep.subr.mxu0 0.0
  %810 = vmatpush1.xpose.msra.mxu0 0.0
  %811 = vmatprep.subr.mxu0 0.0
  %812 = vmatpush1.xpose.msra.mxu0 0.0
  %813 = vmatprep.subr.mxu0 0.0
  %814 = vmatpush1.xpose.msra.mxu0 0.0
  %815 = vmatprep.subr.mxu0 0.0
  %816 = vmatpush1.xpose.msra.mxu0 0.0
  %817 = vmatprep.subr.mxu0 0.0
  %818 = vmatpush1.xpose.msra.mxu0 0.0
  %819 = vmatprep.subr.mxu0 0.0
  %820 = vmatpush1.xpose.msra.mxu0 0.0
  %821 = vmatprep.subr.mxu0 0.0
  %822 = vmatpush1.xpose.msra.mxu0 0.0
  %823 = vmatprep.subr.mxu0 0.0
  %824 = vmatpush1.xpose.msra.mxu0 0.0
  %825 = vmatprep.subr.mxu0 0.0
  %826 = vmatpush1.xpose.msra.mxu0 0.0
  %827 = vmatprep.subr.mxu0 0.0
  %828 = vmatpush1.xpose.msra.mxu0 0.0
  %829 = vmatprep.subr.mxu0 0.0
  %830 = vmatpush1.xpose.msra.mxu0 0.0
  %831 = vmatprep.subr.mxu0 0.0
  %832 = vmatpush1.xpose.msra.mxu0 0.0
  %833 = vmatprep.subr.mxu0 0.0
  %834 = vmatpush1.xpose.msra.mxu0 0.0
  %835 = vmatprep.subr.mxu0 0.0
  %836 = vmatpush1.xpose.msra.mxu0 0.0
  %837 = vmatprep.subr.mxu0 0.0
  %838 = vmatpush1.xpose.msra.mxu0 0.0
  %839 = vmatprep.subr.mxu0 0.0
  %840 = vmatpush1.xpose.msra.mxu0 0.0
  %841 = vmatprep.subr.mxu0 0.0
  %842 = vmatpush1.xpose.msra.mxu0 0.0
  %843 = vmatprep.subr.mxu0 0.0
  %844 = vmatpush1.xpose.msra.mxu0 0.0
  %845 = vmatprep.subr.mxu0 0.0
  %846 = vmatpush1.xpose.msra.mxu0 0.0
  %847 = vmatprep.subr.mxu0 0.0
  %848 = vmatpush1.xpose.msra.mxu0 0.0
  %849 = vmatprep.mubr.f32.mxu0 0.0
  %v850 = vand.u32 %v28, 4294901760
  %851 = vmatmul.mubr.f32.gmra.mrb[0].mxu0 %v850
  %v852 = vpop.f32.mrb[0].mxu0
  %v853 = vadd.f32 %v779, %v852
  %v854 = vpop.f32.mrb[0].mxu0
  %855 = vdwg.mxu0
  %856 = vmatprep.subr.mxu0 0.0
  %v857 = vand.u32 %v480, 4294901760
  %858 = vmatpush1.xpose.msra.mxu0 %v857
  %859 = vmatprep.subr.mxu0 0.0
  %860 = vmatpush1.xpose.msra.mxu0 0.0
  %861 = vmatprep.subr.mxu0 0.0
  %862 = vmatpush1.xpose.msra.mxu0 0.0
  %863 = vmatprep.subr.mxu0 0.0
  %864 = vmatpush1.xpose.msra.mxu0 0.0
  %865 = vmatprep.subr.mxu0 0.0
  %866 = vmatpush1.xpose.msra.mxu0 0.0
  %867 = vmatprep.subr.mxu0 0.0
  %868 = vmatpush1.xpose.msra.mxu0 0.0
  %869 = vmatprep.subr.mxu0 0.0
  %870 = vmatpush1.xpose.msra.mxu0 0.0
  %871 = vmatprep.subr.mxu0 0.0
  %872 = vmatpush1.xpose.msra.mxu0 0.0
  %873 = vmatprep.subr.mxu0 0.0
  %874 = vmatpush1.xpose.msra.mxu0 0.0
  %875 = vmatprep.subr.mxu0 0.0
  %876 = vmatpush1.xpose.msra.mxu0 0.0
  %877 = vmatprep.subr.mxu0 0.0
  %878 = vmatpush1.xpose.msra.mxu0 0.0
  %879 = vmatprep.subr.mxu0 0.0
  %880 = vmatpush1.xpose.msra.mxu0 0.0
  %881 = vmatprep.subr.mxu0 0.0
  %882 = vmatpush1.xpose.msra.mxu0 0.0
  %883 = vmatprep.subr.mxu0 0.0
  %884 = vmatpush1.xpose.msra.mxu0 0.0
  %885 = vmatprep.subr.mxu0 0.0
  %886 = vmatpush1.xpose.msra.mxu0 0.0
  %887 = vmatprep.subr.mxu0 0.0
  %888 = vmatpush1.xpose.msra.mxu0 0.0
  %889 = vmatprep.subr.mxu0 0.0
  %890 = vmatpush1.xpose.msra.mxu0 0.0
  %891 = vmatprep.subr.mxu0 0.0
  %892 = vmatpush1.xpose.msra.mxu0 0.0
  %893 = vmatprep.subr.mxu0 0.0
  %894 = vmatpush1.xpose.msra.mxu0 0.0
  %895 = vmatprep.subr.mxu0 0.0
  %896 = vmatpush1.xpose.msra.mxu0 0.0
  %897 = vmatprep.subr.mxu0 0.0
  %898 = vmatpush1.xpose.msra.mxu0 0.0
  %899 = vmatprep.subr.mxu0 0.0
  %900 = vmatpush1.xpose.msra.mxu0 0.0
  %901 = vmatprep.subr.mxu0 0.0
  %902 = vmatpush1.xpose.msra.mxu0 0.0
  %903 = vmatprep.subr.mxu0 0.0
  %904 = vmatpush1.xpose.msra.mxu0 0.0
  %905 = vmatprep.subr.mxu0 0.0
  %906 = vmatpush1.xpose.msra.mxu0 0.0
  %907 = vmatprep.subr.mxu0 0.0
  %908 = vmatpush1.xpose.msra.mxu0 0.0
  %909 = vmatprep.subr.mxu0 0.0
  %910 = vmatpush1.xpose.msra.mxu0 0.0
  %911 = vmatprep.subr.mxu0 0.0
  %912 = vmatpush1.xpose.msra.mxu0 0.0
  %913 = vmatprep.subr.mxu0 0.0
  %914 = vmatpush1.xpose.msra.mxu0 0.0
  %915 = vmatprep.subr.mxu0 0.0
  %916 = vmatpush1.xpose.msra.mxu0 0.0
  %917 = vmatprep.subr.mxu0 0.0
  %918 = vmatpush1.xpose.msra.mxu0 0.0
  %919 = vmatprep.subr.mxu0 0.0
  %920 = vmatpush1.xpose.msra.mxu0 0.0
  %921 = vmatprep.mubr.f32.mxu0 0.0
  %v922 = vand.u32 %v28, 4294901760
  %923 = vmatmul.mubr.f32.gmra.mrb[0].mxu0 %v922
  %v924 = vpop.f32.mrb[0].mxu0
  %v925 = vadd.f32 %v853, %v924
  %v926 = vpop.f32.mrb[0].mxu0
  %927 = vdwg.mxu0
  %v928 = vlog2.pop %v476
  %v929 = vmul.f32 %v928, 0.6931472
  %v930 = vlog2.pop %v925
  %v931 = vmul.f32 %v930, 0.6931472
  %v932 = vsub.f32 %v929, %v931
  %v933 = vmax.f32 %v932, 1.0000001e-07
  %v934 = vmin.f32 %v933, 16.118095
  %vm935 = vcmask 57344
  %936 = vst.msk [vmem:[%s2] sm:$0x1] %vm935, %v934
  // Predicated region
  $region10: #{_ogc_forward_call.1} parent=0 // pred_check
    _
  $region11: #{_ogc_forward_call.1} parent=0 // pred_check_branch
    %938 = sbr.rel (0) target = $region13
  $region12: #{_ogc_forward_call.1} parent=0 // pred_region
    _
  $region13: #{_ogc_forward_call.1} parent=0 // pred_fallthru
    _
  // Predicated region
  $region14: #{_ogc_forward_call.1} parent=0 // pred_check
    _
  $region15: #{_ogc_forward_call.1} parent=0 // pred_check_branch
    %940 = sbr.rel (0) target = $region17
  $region16: #{_ogc_forward_call.1} parent=0 // pred_region
    _
  $region17: #{_ogc_forward_call.1} parent=0 // pred_fallthru
    _

</llo_original>
